<compile_context>
chip_gen: v5e
topology: v5e:2x2
jax: 0.10.0
libtpu: 0.0.40
codegen_flags: <defaults>
</compile_context>

<pallas_src>
import functools

import jax
import jax.numpy as jnp
from jax.experimental import pallas as pl
from jax.experimental.pallas import tpu as pltpu


def _focal_loss_kernel(logits_ref, side_ref, out_ref, acc_ref, *, gamma, gamma_int):
    """Process one (TN, C) logits tile; accumulate per-row focal terms in VMEM."""
    i = pl.program_id(1)                                   # reduction (tile) axis

    @pl.when(i == 0)
    def _():
        acc_ref[...] = jnp.zeros_like(acc_ref)

    # Cast after load: bf16 travels over HBM, math is f32.
    logits = logits_ref[...].astype(jnp.float32)           # (TN, C)
    side = side_ref[...]                                    # (TN, 2) f32
    alpha_w = side[:, 0:1]                                  # pre-gathered alpha[targets]
    target_logit = side[:, 1:2]                             # pre-gathered logits[r, t[r]]

    # Numerically stable log-sum-exp over the class axis (XLU reduce, EUP exp/log).
    m = jnp.max(logits, axis=-1, keepdims=True)                               # (TN, 1)
    lse = m + jnp.log(jnp.sum(jnp.exp(logits - m), axis=-1, keepdims=True))   # (TN, 1)

    ce = lse - target_logit                 # == F.cross_entropy(..., reduction='none')
    pt = jnp.exp(-ce)
    base = jnp.maximum(1.0 - pt, 0.0)       # clamp: no NaN if rounding pushes pt > 1
    if gamma_int is not None:
        mod = jax.lax.integer_pow(base, gamma_int)   # VPU multiplies, no EUP pow
    else:
        mod = base ** jnp.float32(gamma)

    # Padded rows carry alpha_w == 0 (wrapper zero-pads the side stream), so they
    # contribute exactly 0 — no explicit row mask needed.
    acc_ref[...] += alpha_w * mod * ce                      # (TN, 1) elementwise add

    @pl.when(i == pl.num_programs(1) - 1)
    def _():
        # Single reduce of the per-row accumulator; lane-dense (8, 128) output.
        out_ref[...] = jnp.full(out_ref.shape, jnp.sum(acc_ref[...]), jnp.float32)


def _num_tensorcores():
    """Best-effort TensorCore count of the target chip (2 on v7x, else 1)."""
    try:
        info = pltpu.get_tpu_info()
    except Exception:
        return 1
    for attr in ("num_cores", "core_count", "num_tensorcores",
                 "tensorcore_count", "num_tensor_cores"):
        v = getattr(info, attr, None)
        if isinstance(v, int) and v in (1, 2):
            return v
    return 1


def focal_loss(logits, targets, alpha=None, gamma=2.0, reduction="mean",
               _max_tile_rows=None):
    """Pallas implementation of FocalLoss.forward.

    logits:  (N, C) float32 or bfloat16
    targets: (N,)   integer class ids. NOTE: out-of-range ids are clamped by the
             wrapper-side gather instead of erroring like torch cross_entropy.
    alpha:   optional (C,) per-class weights
    reduction: 'mean' (default) or 'sum'
    """
    # TODO(synk): reduction='none' (unreduced per-sample vector output) is not wired up.
    if reduction not in ("mean", "sum"):
        raise NotImplementedError("only 'mean' and 'sum' reductions are wired up")

    n, c = logits.shape
    itemsize = jnp.dtype(logits.dtype).itemsize

    # Real 2-core split only where 2 TensorCores exist (v7x); else P=1.
    P = _num_tensorcores()

    # VMEM budget per grid step (per core):
    #   2x double-buffered logits input block          : 2 * tn*c*itemsize
    #   ~3x f32 working copies (upcast, exp(x-m), ...) : 3 * tn*c*4
    #   2x double-buffered (tn,2) side blocks + 1x (tn,1) accumulator,
    #      each lane-padded to (tn,128)                : 3 * tn*128*4
    # Target ~24 MiB against the 32 MiB scoped limit (safe on v5e/v6e/v7x).
    per_row = 2 * c * itemsize + 3 * c * 4 + 3 * 128 * 4
    cap = max(8, min(2048, ((24 << 20) // per_row) // 8 * 8))
    if _max_tile_rows is not None:                     # test hook: force multi-tile grid
        cap = min(cap, max(8, (_max_tile_rows // 8) * 8))
    rows_per_core = int(pl.cdiv(n, P))
    tn = int(min(cap, ((rows_per_core + 7) // 8) * 8))
    tiles_per_core = int(pl.cdiv(rows_per_core, tn))
    padded_n = P * tiles_per_core * tn

    # Wrapper-side gathers: alpha[targets] and logits[r, targets[r]] are packed
    # into one lane-contiguous (N, 2) f32 side stream (no int32 targets stream,
    # no in-kernel one-hot).
    tgt = targets.astype(jnp.int32)
    if alpha is None:
        alpha_w = jnp.ones((n, 1), dtype=jnp.float32)
    else:
        alpha_w = jnp.asarray(alpha, dtype=jnp.float32)[tgt].reshape(n, 1)
    target_logit = jnp.take_along_axis(logits, tgt[:, None], axis=-1).astype(jnp.float32)
    side = jnp.concatenate([alpha_w, target_logit], axis=1)            # (N, 2) f32

    pad = padded_n - n
    if pad:
        logits_p = jnp.pad(logits, ((0, pad), (0, 0)))
        side_p = jnp.pad(side, ((0, pad), (0, 0)))      # alpha_w == 0 on padded rows
    else:
        logits_p, side_p = logits, side

    g = float(gamma)
    gamma_int = int(g) if (g.is_integer() and g >= 0) else None

    kernel = functools.partial(_focal_loss_kernel, gamma=g, gamma_int=gamma_int)

    cost = pl.CostEstimate(
        flops=4 * n * c + 12 * n,
        transcendentals=n * (c + 2),
        bytes_accessed=n * c * itemsize + 8 * n + P * 8 * 128 * 4,
    )

    if P > 1:
        first_sem = getattr(pltpu, "CORE_PARALLEL", pltpu.PARALLEL)
    else:
        first_sem = pltpu.ARBITRARY

    partials = pl.pallas_call(
        kernel,
        out_shape=jax.ShapeDtypeStruct((P * 8, 128), jnp.float32),
        grid_spec=pltpu.PrefetchScalarGridSpec(
            num_scalar_prefetch=0,
            grid=(P, tiles_per_core),
            in_specs=[
                pl.BlockSpec((tn, c), lambda p, i: (p * tiles_per_core + i, 0)),
                pl.BlockSpec((tn, 2), lambda p, i: (p * tiles_per_core + i, 0)),
            ],
            out_specs=pl.BlockSpec((8, 128), lambda p, i: (p, 0)),
            scratch_shapes=[pltpu.VMEM((tn, 1), jnp.float32)],
        ),
        compiler_params=pltpu.CompilerParams(
            dimension_semantics=(first_sem, pltpu.ARBITRARY),
            vmem_limit_bytes=32 << 20,
        ),
        cost_estimate=cost,
    )(logits_p, side_p)

    total = jnp.sum(partials[::8, 0])          # one partial per core
    if reduction == "sum":
        return total
    return total / jnp.float32(n)              # 'mean': divide by N exactly once


def _focal_loss_ref(logits, targets, alpha=None, gamma=2.0):
    """Pure-JAX reference mirroring the PyTorch module (reduction='mean')."""
    logits = logits.astype(jnp.float32)
    lse = jax.nn.logsumexp(logits, axis=-1)
    ce = lse - jnp.take_along_axis(logits, targets[:, None], axis=-1)[:, 0]
    if alpha is not None:
        aw = jnp.asarray(alpha, jnp.float32)[targets]
    else:
        aw = 1.0
    pt = jnp.exp(-ce)
    return jnp.mean(aw * (1.0 - pt) ** gamma * ce)


if __name__ == "__main__":
    key = jax.random.PRNGKey(0)
    k1, k2 = jax.random.split(key)

    N, C = 13, 16  # small; N not a multiple of 8 -> exercises zero-padded masking
    logits = jax.random.normal(k1, (N, C), dtype=jnp.float32)
    targets = jax.random.randint(k2, (N,), 0, C, dtype=jnp.int32)
    alpha = jnp.linspace(0.25, 1.0, C, dtype=jnp.float32)

    # f32 logits with per-class alpha (mean reduction).
    out = focal_loss(logits, targets, alpha=alpha, gamma=2.0)
    jax.block_until_ready(out)
    ref = _focal_loss_ref(logits, targets, alpha=alpha, gamma=2.0)
    assert jnp.allclose(out, ref, rtol=1e-5, atol=1e-6), (out, ref)

    # alpha=None default path with 'sum' reduction.
    out_sum = focal_loss(logits, targets, alpha=None, gamma=2.0, reduction="sum")
    jax.block_until_ready(out_sum)
    ref_sum = _focal_loss_ref(logits, targets, alpha=None, gamma=2.0) * N
    assert jnp.allclose(out_sum, ref_sum, rtol=1e-5, atol=1e-5), (out_sum, ref_sum)

    # bf16 logits path (halved HBM traffic; cast to f32 in-kernel).
    logits_bf16 = logits.astype(jnp.bfloat16)
    out_bf = focal_loss(logits_bf16, targets, alpha=alpha, gamma=2.0)
    jax.block_until_ready(out_bf)
    ref_bf = _focal_loss_ref(logits_bf16, targets, alpha=alpha, gamma=2.0)
    assert jnp.allclose(out_bf, ref_bf, rtol=1e-4, atol=1e-5), (out_bf, ref_bf)

    # Multi-tile accumulation path (force tiny tiles so tiles_per_core > 1).
    N2 = 53
    k3, k4 = jax.random.split(jax.random.PRNGKey(1))
    logits2 = jax.random.normal(k3, (N2, C), dtype=jnp.float32)
    targets2 = jax.random.randint(k4, (N2,), 0, C, dtype=jnp.int32)
    out2 = focal_loss(logits2, targets2, alpha=alpha, gamma=2.0, _max_tile_rows=8)
    jax.block_until_ready(out2)
    ref2 = _focal_loss_ref(logits2, targets2, alpha=alpha, gamma=2.0)
    assert jnp.allclose(out2, ref2, rtol=1e-5, atol=1e-6), (out2, ref2)

    print("KERNEL_OK")
</pallas_src>

<mosaic_0001>
module attributes {stable_mosaic.version = 11 : i64} {
  func.func @_focal_loss_kernel(%arg0: i32, %arg1: i32, %arg2: memref<16x16xf32, #tpu.memory_space<vmem>>, %arg3: memref<16x2xf32, #tpu.memory_space<vmem>>, %arg4: memref<8x128xf32, #tpu.memory_space<vmem>>, %arg5: memref<16x1xf32, #tpu.memory_space<vmem>>) attributes {dimension_semantics = [#tpu.dimension_semantics<arbitrary>, #tpu.dimension_semantics<arbitrary>], iteration_bounds = array<i64: 1, 1>, scalar_prefetch = 0 : i64, scratch_operands = 1 : i64, tpu.core_type = #tpu.core_type<tc>, window_params = [{transform_indices = @transform_0, window_bounds = array<i64: 16, 16>}, {transform_indices = @transform_1, window_bounds = array<i64: 16, 2>}, {transform_indices = @transform_2, window_bounds = array<i64: 8, 128>}]} {
    %c0_i32 = arith.constant 0 : i32
    %0 = arith.cmpi eq, %arg1, %c0_i32 : i32
    %1 = arith.extui %0 : i1 to i32
    %c0_i32_0 = arith.constant 0 : i32
    %2 = arith.cmpi ne, %1, %c0_i32_0 : i32
    scf.if %2 {
      %cst_14 = arith.constant 0.000000e+00 : f32
      %33 = vector.broadcast %cst_14 : f32 to vector<16x1xf32>
      %c0_15 = arith.constant 0 : index
      %c0_16 = arith.constant 0 : index
      %34 = vector.load %arg5[%c0_15, %c0_16] : memref<16x1xf32, #tpu.memory_space<vmem>>, vector<16x1xf32>
      tpu.vector_store %arg5[%c0_15, %c0_16], %33 {strides = array<i32>} : memref<16x1xf32, #tpu.memory_space<vmem>>, vector<16x1xf32>,
    } else {
    }
    %c0 = arith.constant 0 : index
    %c0_1 = arith.constant 0 : index
    %3 = vector.load %arg2[%c0, %c0_1] : memref<16x16xf32, #tpu.memory_space<vmem>>, vector<16x16xf32>
    %c0_2 = arith.constant 0 : index
    %c0_3 = arith.constant 0 : index
    %4 = vector.load %arg3[%c0_2, %c0_3] : memref<16x2xf32, #tpu.memory_space<vmem>>, vector<16x2xf32>
    %5 = vector.extract_strided_slice %4 {offsets = [0, 0], sizes = [16, 1], strides = [1, 1]} : vector<16x2xf32> to vector<16x1xf32>
    %6 = vector.extract_strided_slice %4 {offsets = [0, 1], sizes = [16, 1], strides = [1, 1]} : vector<16x2xf32> to vector<16x1xf32>
    %cst = arith.constant dense<0xFF800000> : vector<16xf32>
    %7 = vector.multi_reduction <maximumf>, %3, %cst [1] : vector<16x16xf32> to vector<16xf32>
    %8 = vector.shape_cast %7 : vector<16xf32> to vector<16x1xf32>
    %9 = vector.broadcast %8 : vector<16x1xf32> to vector<16x16xf32>
    %10 = arith.subf %3, %9 : vector<16x16xf32>
    %11 = math.exp %10 : vector<16x16xf32>
    %cst_4 = arith.constant dense<0.000000e+00> : vector<16xf32>
    %12 = vector.multi_reduction <add>, %11, %cst_4 [1] : vector<16x16xf32> to vector<16xf32>
    %13 = vector.shape_cast %12 : vector<16xf32> to vector<16x1xf32>
    %14 = math.log %13 : vector<16x1xf32>
    %15 = arith.addf %8, %14 : vector<16x1xf32>
    %16 = arith.subf %15, %6 : vector<16x1xf32>
    %cst_5 = arith.constant 0.000000e+00 : f32
    %17 = vector.broadcast %cst_5 : f32 to vector<16x1xf32>
    %18 = arith.subf %17, %16 : vector<16x1xf32>
    %19 = math.exp %18 : vector<16x1xf32>
    %cst_6 = arith.constant 1.000000e+00 : f32
    %20 = vector.broadcast %cst_6 : f32 to vector<16x1xf32>
    %21 = arith.subf %20, %19 : vector<16x1xf32>
    %cst_7 = arith.constant 0.000000e+00 : f32
    %22 = vector.broadcast %cst_7 : f32 to vector<16x1xf32>
    %23 = arith.maximumf %21, %22 : vector<16x1xf32>
    %24 = arith.mulf %23, %23 : vector<16x1xf32>
    %c0_8 = arith.constant 0 : index
    %c0_9 = arith.constant 0 : index
    %25 = vector.load %arg5[%c0_8, %c0_9] : memref<16x1xf32, #tpu.memory_space<vmem>>, vector<16x1xf32>
    %26 = arith.mulf %5, %24 : vector<16x1xf32>
    %27 = arith.mulf %26, %16 : vector<16x1xf32>
    %28 = arith.addf %25, %27 : vector<16x1xf32>
    %c0_10 = arith.constant 0 : index
    %c0_11 = arith.constant 0 : index
    %29 = vector.load %arg5[%c0_10, %c0_11] : memref<16x1xf32, #tpu.memory_space<vmem>>, vector<16x1xf32>
    tpu.vector_store %arg5[%c0_10, %c0_11], %28 {strides = array<i32>} : memref<16x1xf32, #tpu.memory_space<vmem>>, vector<16x1xf32>,
    %c0_i32_12 = arith.constant 0 : i32
    %30 = arith.cmpi eq, %arg1, %c0_i32_12 : i32
    %31 = arith.extui %30 : i1 to i32
    %c0_i32_13 = arith.constant 0 : i32
    %32 = arith.cmpi ne, %31, %c0_i32_13 : i32
    scf.if %32 {
      %c0_14 = arith.constant 0 : index
      %c0_15 = arith.constant 0 : index
      %33 = vector.load %arg5[%c0_14, %c0_15] : memref<16x1xf32, #tpu.memory_space<vmem>>, vector<16x1xf32>
      %34 = vector.shape_cast %33 : vector<16x1xf32> to vector<1x16x1xf32>
      %cst_16 = arith.constant dense<0.000000e+00> : vector<1xf32>
      %35 = vector.multi_reduction <add>, %34, %cst_16 [1, 2] : vector<1x16x1xf32> to vector<1xf32>
      %36 = vector.shape_cast %35 : vector<1xf32> to vector<1x1x1xf32>
      %37 = vector.extract %36[0, 0, 0] : f32 from vector<1x1x1xf32>
      %38 = vector.broadcast %37 : f32 to vector<8x128xf32>
      %c0_17 = arith.constant 0 : index
      %c0_18 = arith.constant 0 : index
      %39 = vector.load %arg4[%c0_17, %c0_18] : memref<8x128xf32, #tpu.memory_space<vmem>>, vector<8x128xf32>
      tpu.vector_store %arg4[%c0_17, %c0_18], %38 {strides = array<i32>} : memref<8x128xf32, #tpu.memory_space<vmem>>, vector<8x128xf32>,
    } else {
    }
    return
  }
  func.func @transform_0(%arg0: i32, %arg1: i32) -> (i32, i32) {
    %c1_i32 = arith.constant 1 : i32
    %0 = arith.muli %arg0, %c1_i32 : i32
    %1 = arith.addi %0, %arg1 : i32
    %c0_i32 = arith.constant 0 : i32
    %c0_i32_0 = arith.constant 0 : i32
    return %1, %c0_i32 : i32, i32
  }
  func.func @transform_1(%arg0: i32, %arg1: i32) -> (i32, i32) {
    %c1_i32 = arith.constant 1 : i32
    %0 = arith.muli %arg0, %c1_i32 : i32
    %1 = arith.addi %0, %arg1 : i32
    %c0_i32 = arith.constant 0 : i32
    %c0_i32_0 = arith.constant 0 : i32
    return %1, %c0_i32 : i32, i32
  }
  func.func @transform_2(%arg0: i32, %arg1: i32) -> (i32, i32) {
    %c0_i32 = arith.constant 0 : i32
    %c0_i32_0 = arith.constant 0 : i32
    return %arg0, %c0_i32 : i32, i32
  }
}

</mosaic_0001>

<llo_original>
// kernel: tpu_custom_call.1
$region0: #{tpu_custom_call.1}
  #allocation0 [shape = 'u32[]', space=smem, size = 0x4, offset = 0x4, fixed_abs, tag = 'smem constant byte address 0x4 - core index']
  #allocation1 [shape = 'u32[72,128]{1,0:T(1,128)}', space=vmem, size = 0x9000, scoped, tag = 'internal scratch']
  #allocation2 [shape = 'f32[16,1]{1,0:T(8,128)}', space=vmem, size = 0x2000, scoped, tag = 'scratch operand']
  %s0 = inlined_call_operand.vmem [shape: f32[16,16], index: 0, kind: input, shape index: {}]
  %s1 = inlined_call_operand.vmem [shape: f32[16,2], index: 1, kind: input, shape index: {}]
  %s2 = inlined_call_operand.hbm [shape: f32[8,128], index: 2, kind: output, shape index: {}]
  %s3 = sld [smem:[#allocation0]]
  $region26: #{tpu_custom_call.1} parent=0
    _
  %s5 = ssub.s32 1, %s3
  %s6 = scalar_select 0, %s5, %s3
  $region1: #{tpu_custom_call.1} parent=0
    #allocation3 [shape = 'u8[4096]{0}', space=vmem, size = 0x1000, scoped, tag = 'output window, operand 0, single buffered']
    #allocation4 [shape = 's32[1]{0}', space=sflag, size = 0x4, scoped, tag = 'scoped memory for tpu_custom_call.1']
    %7 = vsyncpa [#allocation4], 0
    // Predicated region
    $region2: #{tpu_custom_call.1} parent=1 // pred_check
      _
    $region3: #{tpu_custom_call.1} parent=1 // pred_check_branch
      %9 = sbr.rel (0) target = $region5
    $region4: #{tpu_custom_call.1} parent=1 // pred_region
      %s10 = sadd.s32 0, 0
      %s11 = smul.u32 2, %s10
      %p12 = scmp.lt.s32.totalorder %s11, 1
      %s13 = scalar_select %p12, %s11, 1
      %s14 = smul.addr %s13, 8
      %s15 = scalar_lea.vmem %s0, %s14
      %s16 = sadd.s32 0, 0
      %s17 = smul.u32 2, %s16
    $region5: #{tpu_custom_call.1} parent=1 // pred_fallthru
      _
    // Predicated region
    $region6: #{tpu_custom_call.1} parent=1 // pred_check
      _
    $region7: #{tpu_custom_call.1} parent=1 // pred_check_branch
      %19 = sbr.rel (0) target = $region9
    $region8: #{tpu_custom_call.1} parent=1 // pred_region
      %s20 = sadd.s32 0, 0
      %s21 = smul.u32 2, %s20
      %p22 = scmp.lt.s32.totalorder %s21, 1
      %s23 = scalar_select %p22, %s21, 1
      %s24 = smul.addr %s23, 8
      %s25 = scalar_lea.vmem %s1, %s24
      %s26 = sadd.s32 0, 0
      %s27 = smul.u32 2, %s26
    $region9: #{tpu_custom_call.1} parent=1 // pred_fallthru
      _
    %s28 = sadd.s32 0, 0
    %s29 = smul.u32 2, %s28
    %p30 = scmp.lt.s32.totalorder %s29, 1
    %s31 = scalar_select %p30, %s29, 1
    %s32 = smul.addr %s31, 8
    %s33 = scalar_lea.vmem %s0, %s32
    %s34 = sadd.s32 0, 0
    %s35 = smul.u32 2, %s34
    %p36 = scmp.lt.s32.totalorder %s35, 1
    %s37 = scalar_select %p36, %s35, 1
    %s38 = smul.addr %s37, 8
    %s39 = scalar_lea.vmem %s1, %s38
    %s40 = sadd.s32 0, 0
    %s41 = smul.u32 2, %s40
    %p42 = scmp.lt.s32.totalorder %s41, 1
    %s43 = scalar_select %p42, %s41, 1
    %s44 = smul.addr %s43, 8
    %s45 = scalar_lea.vmem %s0, %s44
    %s46 = sadd.s32 0, 0
    %s47 = smul.u32 2, %s46
    %s48 = sadd.s32 0, 0
    %s49 = smul.u32 2, %s48
    %p50 = scmp.lt.s32.totalorder %s49, 1
    %s51 = scalar_select %p50, %s49, 1
    %s52 = smul.addr %s51, 8
    %s53 = scalar_lea.vmem %s1, %s52
    %s54 = sadd.s32 0, 0
    %s55 = smul.u32 2, %s54
    %p56 = scmp.eq.s32.totalorder 0, 0
    // Predicated region
    $region10: #{tpu_custom_call.1} parent=1 // pred_check
      %p57 = pneg %p56
    $region11: #{tpu_custom_call.1} parent=1 // pred_check_branch
      %59 = sbr.rel (%p57) target = $region13
    $region12: #{tpu_custom_call.1} parent=1 // pred_region
      %vm60 = vcmask 7168
      %61 = vst.msk [vmem:[#allocation2] sm:$0xff] %vm60, 0.0
      %62 = vst.msk [vmem:[#allocation2 + $0x8] sm:$0xff] %vm60, 0.0
    $region13: #{tpu_custom_call.1} parent=1 // pred_fallthru
      _
    %v63 = vld [vmem:[%s45] sm:$0xff]
    %v64 = vld [vmem:[%s45 + $0x8] sm:$0xff]
    %v65 = vld [vmem:[%s53] sm:$0xff]
    %v66 = vld [vmem:[%s53 + $0x8] sm:$0xff]
    %vm67 = vcmask 130048
    %v68 = vsel %vm67, %v63, -inf
    %69 = vmax.xlane.f32.xlu0 %v68
    %v70 = vpop.xlane.xlu0 %69
    %v71 = vsel %vm67, %v64, -inf
    %72 = vmax.xlane.f32.xlu0 %v71
    %v73 = vpop.xlane.xlu0 %72
    %v74 = vsub.f32 %v63, %v70
    %v75 = vsub.f32 %v64, %v73
    %v76 = vmul.f32 %v74, 1.442695
    %v77 = vpow.pop %v76
    %v78 = vmul.f32 %v75, 1.442695
    %v79 = vpow.pop %v78
    %v80 = vsel %vm67, %v77, 0.0
    %81 = vadd.xlane.f32.xlu0 %v80
    %v82 = vpop.xlane.xlu0 %81
    %v83 = vsel %vm67, %v79, 0.0
    %84 = vadd.xlane.f32.xlu0 %v83
    %v85 = vpop.xlane.xlu0 %84
    %v86 = vlog2.pop %v82
    %v87 = vmul.f32 %v86, 0.6931472
    %v88 = vlog2.pop %v85
    %v89 = vmul.f32 %v88, 0.6931472
    %v90 = vadd.f32 %v70, %v87
    %v91 = vadd.f32 %v73, %v89
    %v92 = vsub.f32 %v90, %v65
    %v93 = vsub.f32 %v91, %v66
    %v94 = vsub.f32 0.0, %v92
    %v95 = vsub.f32 0.0, %v93
    %v96 = vmul.f32 %v94, 1.442695
    %v97 = vpow.pop %v96
    %v98 = vmul.f32 %v95, 1.442695
    %v99 = vpow.pop %v98
    %v100 = vsub.f32 1.0, %v97
    %v101 = vsub.f32 1.0, %v99
    %v102 = vmax.f32 %v100, 0.0
    %v103 = vmax.f32 %v101, 0.0
    %v104 = vmul.f32 %v102, %v102
    %v105 = vmul.f32 %v103, %v103
    %v106 = vld [vmem:[#allocation2] sm:$0xff]
    %v107 = vld [vmem:[#allocation2 + $0x8] sm:$0xff]
    %110 = vrot.lane.b32.xlu0 %v104, 127
    %v111 = vpop.permute.xlu0 %110
    %112 = vrot.lane.b32.xlu0 %v105, 127
    %v113 = vpop.permute.xlu0 %112
    %v116 = vmul.f32 %v65, %v111
    %v117 = vmul.f32 %v66, %v113
    %120 = vrot.lane.b32.xlu0 %v92, 127
    %v121 = vpop.permute.xlu0 %120
    %122 = vrot.lane.b32.xlu0 %v93, 127
    %v123 = vpop.permute.xlu0 %122
    %v126 = vmul.f32 %v116, %v121
    %v127 = vmul.f32 %v117, %v123
    %v128 = vadd.f32 %v106, %v126
    %v129 = vadd.f32 %v107, %v127
    %vm130 = vcmask 7168
    %131 = vst.msk [vmem:[#allocation2] sm:$0xff] %vm130, %v128
    %132 = vst.msk [vmem:[#allocation2 + $0x8] sm:$0xff] %vm130, %v129
    // Predicated region
    $region14: #{tpu_custom_call.1} parent=1 // pred_check
      %p133 = pneg %p56
    $region15: #{tpu_custom_call.1} parent=1 // pred_check_branch
      %135 = sbr.rel (%p133) target = $region17
    $region16: #{tpu_custom_call.1} parent=1 // pred_region
      %v136 = vld [vmem:[#allocation2] sm:$0xff]
      %v137 = vld [vmem:[#allocation2 + $0x8] sm:$0xff]
      %v138 = vsel %vm130, %v136, 0.0
      %v139 = vsel %vm130, %v137, 0.0
      %v140 = vadd.f32 %v138, %v139
      %141 = vadd.xlane.f32.xlu0 %v140
      %v142 = vpop.xlane.xlu0 %141
      %v143 = vrot.slane %v142, 4
      %v144 = vadd.f32 %v142, %v143
      %v145 = vrot.slane %v144, 2
      %v146 = vadd.f32 %v144, %v145
      %v147 = vrot.slane %v146, 1
      %v148 = vadd.f32 %v146, %v147
      %s149 = vtos %v148
      %v150 = vstv %s149
      %151 = vst [vmem:[#allocation3] sm:$0xff] %v150
    $region17: #{tpu_custom_call.1} parent=1 // pred_fallthru
      _
    // Predicated region
    $region18: #{tpu_custom_call.1} parent=1 // pred_check
      _
    $region19: #{tpu_custom_call.1} parent=1 // pred_check_branch
      %153 = sbr.rel (0) target = $region21
    $region20: #{tpu_custom_call.1} parent=1 // pred_region
      %155 = vsyncadd [#allocation4], 0
      %s157 = sshll.u32 [#allocation3], 4
      %s158 = int_to_ptr.vmem [resolvable:$true] %s157
      %s159 = sshll.u32 %s2, 4
      %s160 = int_to_ptr.hbm [resolvable:$true] %s159
      %162 = dma.vmem_to_hbm [thread:$0]  %s158, 128, %s160, [#allocation4]
    $region21: #{tpu_custom_call.1} parent=1 // pred_fallthru
      _
    // Predicated region
    $region22: #{tpu_custom_call.1} parent=1 // pred_check
      _
    $region23: #{tpu_custom_call.1} parent=1 // pred_check_branch
      %164 = sbr.rel (0) target = $region25
    $region24: #{tpu_custom_call.1} parent=1 // pred_region
      %166 = dma.done [#allocation4], 128
    $region25: #{tpu_custom_call.1} parent=1 // pred_fallthru
      _
    %167 = vsyncpa [#allocation4], 1

</llo_original>
